<compile_context>
chip_gen: v7x
topology: tpu7x:2x2x1
jax: 0.10.0
libtpu: 0.0.40
codegen_flags: <defaults>
</compile_context>

<pallas_src>
import functools

import jax
import jax.numpy as jnp
from jax.experimental import pallas as pl
from jax.experimental.pallas import tpu as pltpu


def _round_up(x: int, m: int) -> int:
    return ((x + m - 1) // m) * m


def _attn_general_kernel(h_ref, w_ref, enc_ref, out_ref, hq_ref, *, seq_len, block_l):
    """One L-tile of energies + final softmax.

    h_ref:   (B, H)          f32   decoder hidden (squeezed)
    w_ref:   (H, H)          f32   nn.Linear weight (y = x @ W.T + b)
    enc_ref: (B, TL, H)      f32   current L tile of encoder outputs (batch-major)
    out_ref: (B, L_pad)      f32   resident output block (energies, then softmax)
    hq_ref:  (B, H)          f32   scratch: hidden @ W (weight folded into query)
    """
    l = pl.program_id(0)

    # Fold the weight into the query once:  hq[b,h] = sum_j hidden[b,j] * W[j,h].
    # (hidden . (enc @ W.T)  ==  (hidden @ W) . enc, so no W.T is needed.)
    @pl.when(l == 0)
    def _():
        hq_ref[...] = jnp.dot(
            h_ref[...], w_ref[...], preferred_element_type=jnp.float32
        )

    # Energies for this tile: e[b, t] = sum_h hq[b,h] * enc[b,t,h]  (lane reduce).
    enc = enc_ref[...].astype(jnp.float32)          # (B, TL, H)
    hq = hq_ref[...]                                # (B, H)
    e_blk = jnp.sum(enc * hq[:, None, :], axis=-1)  # (B, TL)

    start = pl.multiple_of(l * block_l, block_l)    # lane-aligned store offset
    out_ref[:, pl.ds(start, block_l)] = e_blk

    # Finalize: masked, numerically stable softmax over the padded row.
    @pl.when(l == pl.num_programs(0) - 1)
    def _():
        e = out_ref[...]                                           # (B, L_pad)
        col = jax.lax.broadcasted_iota(jnp.int32, e.shape, 1)
        valid = col < seq_len
        e = jnp.where(valid, e, -jnp.inf)
        m = jnp.max(e, axis=-1, keepdims=True)
        ex = jnp.where(valid, jnp.exp(e - m), 0.0)
        s = jnp.sum(ex, axis=-1, keepdims=True)
        out_ref[...] = ex * pl.reciprocal(s, approx=True)


def attn_general(hidden, encoder_outputs, weight, bias=None, *, enc_dtype=None):
    """hidden: (1, B, H), encoder_outputs: (L, B, H) -> (B, 1, L) attention weights.

    `bias` is accepted for API parity but intentionally unused: it cancels in the
    softmax over L. `enc_dtype=jnp.bfloat16` optionally halves HBM bytes for the
    streamed encoder tensor (accumulation stays f32 in-kernel).
    """
    del bias
    L, B, H = encoder_outputs.shape
    h2d = hidden.reshape(B, H).astype(jnp.float32)

    # Layout plumbing (one-time, outside the kernel): seq-major -> batch-major so
    # the H-reduction is over lanes and energies come out directly as (B, L).
    enc = jnp.transpose(encoder_outputs, (1, 0, 2))            # (B, L, H)
    if enc_dtype is not None:
        enc = enc.astype(enc_dtype)

    # Lane-dense output: pad L up to a multiple of 128; tile L at <=512.
    block_l = _round_up(min(L, 512), 128)
    l_pad = _round_up(L, block_l)
    if l_pad != L:
        enc = jnp.pad(enc, ((0, 0), (0, l_pad - L), (0, 0)))
    n_blocks = l_pad // block_l

    grid_spec = pltpu.PrefetchScalarGridSpec(
        num_scalar_prefetch=0,
        grid=(n_blocks,),
        in_specs=[
            pl.BlockSpec((B, H), lambda l: (0, 0)),            # hidden (resident)
            pl.BlockSpec((H, H), lambda l: (0, 0)),            # weight (resident)
            pl.BlockSpec((B, block_l, H), lambda l: (0, l, 0)),  # streamed enc tile
        ],
        out_specs=pl.BlockSpec((B, l_pad), lambda l: (0, 0)),  # resident accumulator
        scratch_shapes=[pltpu.VMEM((B, H), jnp.float32)],      # hq = hidden @ W
    )

    cost = pl.CostEstimate(
        flops=2 * B * H * H + 2 * B * l_pad * H,
        transcendentals=B * l_pad,
        bytes_accessed=int(
            B * l_pad * H * enc.dtype.itemsize        # encoder stream (dominant)
            + (B * H + H * H) * 4                     # hidden + weight
            + B * l_pad * 4                           # output
        ),
    )

    kernel = functools.partial(_attn_general_kernel, seq_len=L, block_l=block_l)
    out = pl.pallas_call(
        kernel,
        out_shape=jax.ShapeDtypeStruct((B, l_pad), jnp.float32),
        grid_spec=grid_spec,
        compiler_params=pltpu.CompilerParams(
            # Single L axis is a reduction over the resident output block.
            # TODO(synk): for large B on v7x, add a leading "parallel" B axis so
            # work shards across the two TensorCores.
            dimension_semantics=("arbitrary",),
        ),
        cost_estimate=cost,
    )(h2d, weight.astype(jnp.float32), enc)

    return out[:, None, :L]                                    # (B, 1, L)


def _reference(hidden, encoder_outputs, weight, bias):
    """Pure-JAX reference mirroring the PyTorch loops (bias included)."""
    proj = jnp.einsum("lbh,kh->lbk", encoder_outputs, weight) + bias   # (L,B,H)
    energies = jnp.einsum("bh,lbh->bl", hidden[0], proj)               # (B,L)
    return jax.nn.softmax(energies, axis=-1)[:, None, :]


if __name__ == "__main__":
    B, L, H = 2, 8, 32

    key = jax.random.PRNGKey(0)
    k1, k2, k3, k4 = jax.random.split(key, 4)

    hidden = jax.random.normal(k1, (1, B, H), dtype=jnp.float32)
    encoder_outputs = jax.random.normal(k2, (L, B, H), dtype=jnp.float32)
    # Deterministic nn.Linear(H, H) parameters (synthetic init).
    weight = jax.random.normal(k3, (H, H), dtype=jnp.float32) * (1.0 / jnp.sqrt(H))
    bias = jax.random.normal(k4, (H,), dtype=jnp.float32) * 0.01

    out = attn_general(hidden, encoder_outputs, weight, bias)
    out = jax.block_until_ready(out)

    ref = _reference(hidden, encoder_outputs, weight, bias)
    assert out.shape == (B, 1, L)
    # Tolerance accounts for the approximate (EUP) reciprocal in the softmax
    # normalization; the bias term cancels exactly in the softmax.
    assert jnp.allclose(out, ref, atol=2e-3, rtol=2e-3)
    assert jnp.allclose(jnp.sum(out, axis=-1), 1.0, atol=2e-3)

    print("KERNEL_OK")
</pallas_src>

<mosaic_0001>
module attributes {stable_mosaic.version = 11 : i64} {
  func.func @_attn_general_kernel(%arg0: i32, %arg1: memref<2x32xf32, #tpu.memory_space<vmem>>, %arg2: memref<32x32xf32, #tpu.memory_space<vmem>>, %arg3: memref<2x128x32xf32, #tpu.memory_space<vmem>>, %arg4: memref<2x128xf32, #tpu.memory_space<vmem>>, %arg5: memref<2x32xf32, #tpu.memory_space<vmem>>) attributes {dimension_semantics = [#tpu.dimension_semantics<arbitrary>], iteration_bounds = array<i64: 1>, scalar_prefetch = 0 : i64, scratch_operands = 1 : i64, tpu.core_type = #tpu.core_type<tc>, window_params = [{pipeline_mode = #tpu.pipeline_mode<synchronous>, transform_indices = @transform_0, window_bounds = array<i64: 2, 32>}, {pipeline_mode = #tpu.pipeline_mode<synchronous>, transform_indices = @transform_1, window_bounds = array<i64: 32, 32>}, {transform_indices = @transform_2, window_bounds = array<i64: 2, 128, 32>}, {pipeline_mode = #tpu.pipeline_mode<synchronous>, transform_indices = @transform_3, window_bounds = array<i64: 2, 128>}]} {
    %c0_i32 = arith.constant 0 : i32
    %0 = arith.cmpi eq, %arg0, %c0_i32 : i32
    %1 = arith.extui %0 : i1 to i32
    %c0_i32_0 = arith.constant 0 : i32
    %2 = arith.cmpi ne, %1, %c0_i32_0 : i32
    scf.if %2 {
      %c0_8 = arith.constant 0 : index
      %c0_9 = arith.constant 0 : index
      %16 = vector.load %arg1[%c0_8, %c0_9] : memref<2x32xf32, #tpu.memory_space<vmem>>, vector<2x32xf32>
      %c0_10 = arith.constant 0 : index
      %c0_11 = arith.constant 0 : index
      %17 = vector.load %arg2[%c0_10, %c0_11] : memref<32x32xf32, #tpu.memory_space<vmem>>, vector<32x32xf32>
      %cst_12 = arith.constant dense<0.000000e+00> : vector<2x32xf32>
      %18 = tpu.matmul %16, %17, %cst_12 {dimension_numbers = #tpu.dot_dimension_numbers<[1], [0], [0], [1], [0, 0, 1, 1], [], []>} : vector<2x32xf32>, vector<32x32xf32>, vector<2x32xf32> -> vector<2x32xf32>
      %c0_13 = arith.constant 0 : index
      %c0_14 = arith.constant 0 : index
      %19 = vector.load %arg5[%c0_13, %c0_14] : memref<2x32xf32, #tpu.memory_space<vmem>>, vector<2x32xf32>
      tpu.vector_store %arg5[%c0_13, %c0_14], %18 {strides = array<i32>} : memref<2x32xf32, #tpu.memory_space<vmem>>, vector<2x32xf32>,
    } else {
    }
    %c0 = arith.constant 0 : index
    %c0_1 = arith.constant 0 : index
    %c0_2 = arith.constant 0 : index
    %3 = vector.load %arg3[%c0, %c0_1, %c0_2] : memref<2x128x32xf32, #tpu.memory_space<vmem>>, vector<2x128x32xf32>
    %c0_3 = arith.constant 0 : index
    %c0_4 = arith.constant 0 : index
    %4 = vector.load %arg5[%c0_3, %c0_4] : memref<2x32xf32, #tpu.memory_space<vmem>>, vector<2x32xf32>
    %5 = vector.shape_cast %4 : vector<2x32xf32> to vector<2x1x32xf32>
    %6 = vector.broadcast %5 : vector<2x1x32xf32> to vector<2x128x32xf32>
    %7 = arith.mulf %3, %6 : vector<2x128x32xf32>
    %cst = arith.constant dense<0.000000e+00> : vector<2x128xf32>
    %8 = vector.multi_reduction <add>, %7, %cst [2] : vector<2x128x32xf32> to vector<2x128xf32>
    %c128_i32 = arith.constant 128 : i32
    %9 = arith.muli %arg0, %c128_i32 : i32
    %10 = tpu.assume_multiple %9, 128 : i32
    %c0_5 = arith.constant 0 : index
    %11 = arith.index_cast %10 : i32 to index
    %12 = vector.load %arg4[%c0_5, %11] : memref<2x128xf32, #tpu.memory_space<vmem>>, vector<2x128xf32>
    tpu.vector_store %arg4[%c0_5, %11], %8 {strides = array<i32>} : memref<2x128xf32, #tpu.memory_space<vmem>>, vector<2x128xf32>,
    %c0_i32_6 = arith.constant 0 : i32
    %13 = arith.cmpi eq, %arg0, %c0_i32_6 : i32
    %14 = arith.extui %13 : i1 to i32
    %c0_i32_7 = arith.constant 0 : i32
    %15 = arith.cmpi ne, %14, %c0_i32_7 : i32
    scf.if %15 {
      %c0_8 = arith.constant 0 : index
      %c0_9 = arith.constant 0 : index
      %16 = vector.load %arg4[%c0_8, %c0_9] : memref<2x128xf32, #tpu.memory_space<vmem>>, vector<2x128xf32>
      %17 = tpu.iota {dimensions = array<i32: 1>} : vector<2x128xi32>
      %c8_i32 = arith.constant 8 : i32
      %18 = vector.broadcast %c8_i32 : i32 to vector<2x128xi32>
      %19 = arith.cmpi slt, %17, %18 : vector<2x128xi32>
      %cst_10 = arith.constant 0xFF800000 : f32
      %20 = vector.broadcast %cst_10 : f32 to vector<2x128xf32>
      %21 = arith.select %19, %16, %20 : vector<2x128xi1>, vector<2x128xf32>
      %cst_11 = arith.constant dense<0xFF800000> : vector<2xf32>
      %22 = vector.multi_reduction <maximumf>, %21, %cst_11 [1] : vector<2x128xf32> to vector<2xf32>
      %23 = vector.shape_cast %22 : vector<2xf32> to vector<2x1xf32>
      %24 = vector.broadcast %23 : vector<2x1xf32> to vector<2x128xf32>
      %25 = arith.subf %21, %24 : vector<2x128xf32>
      %26 = math.exp %25 : vector<2x128xf32>
      %cst_12 = arith.constant 0.000000e+00 : f32
      %27 = vector.broadcast %cst_12 : f32 to vector<2x128xf32>
      %28 = arith.select %19, %26, %27 : vector<2x128xi1>, vector<2x128xf32>
      %cst_13 = arith.constant dense<0.000000e+00> : vector<2xf32>
      %29 = vector.multi_reduction <add>, %28, %cst_13 [1] : vector<2x128xf32> to vector<2xf32>
      %30 = vector.shape_cast %29 : vector<2xf32> to vector<2x1xf32>
      %31 = tpu.reciprocal %30 {approx = true} : vector<2x1xf32> -> vector<2x1xf32>
      %32 = vector.broadcast %31 : vector<2x1xf32> to vector<2x128xf32>
      %33 = arith.mulf %28, %32 : vector<2x128xf32>
      %c0_14 = arith.constant 0 : index
      %c0_15 = arith.constant 0 : index
      %34 = vector.load %arg4[%c0_14, %c0_15] : memref<2x128xf32, #tpu.memory_space<vmem>>, vector<2x128xf32>
      tpu.vector_store %arg4[%c0_14, %c0_15], %33 {strides = array<i32>} : memref<2x128xf32, #tpu.memory_space<vmem>>, vector<2x128xf32>,
    } else {
    }
    return
  }
  func.func @transform_0(%arg0: i32) -> (i32, i32) {
    %c0_i32 = arith.constant 0 : i32
    %c0_i32_0 = arith.constant 0 : i32
    %c0_i32_1 = arith.constant 0 : i32
    return %c0_i32, %c0_i32_0 : i32, i32
  }
  func.func @transform_1(%arg0: i32) -> (i32, i32) {
    %c0_i32 = arith.constant 0 : i32
    %c0_i32_0 = arith.constant 0 : i32
    %c0_i32_1 = arith.constant 0 : i32
    return %c0_i32, %c0_i32_0 : i32, i32
  }
  func.func @transform_2(%arg0: i32) -> (i32, i32, i32) {
    %c0_i32 = arith.constant 0 : i32
    %c0_i32_0 = arith.constant 0 : i32
    %c0_i32_1 = arith.constant 0 : i32
    return %c0_i32, %arg0, %c0_i32_0 : i32, i32, i32
  }
  func.func @transform_3(%arg0: i32) -> (i32, i32) {
    %c0_i32 = arith.constant 0 : i32
    %c0_i32_0 = arith.constant 0 : i32
    %c0_i32_1 = arith.constant 0 : i32
    return %c0_i32, %c0_i32_0 : i32, i32
  }
}

</mosaic_0001>

<llo_original>
// kernel: tpu_custom_call.1
$region0: #{tpu_custom_call.1}
  #allocation0 [shape = 'u32[]', space=smem, size = 0x4, offset = 0x4, fixed_abs, tag = 'smem constant byte address 0x4 - core index']
  #allocation1 [shape = 'u32[144,128]{1,0:T(1,128)}', space=vmem, size = 0x12000, scoped, tag = 'internal scratch']
  #allocation2 [shape = 'f32[2,32]{1,0:T(2,128)}', space=vmem, size = 0x400, scoped, tag = 'scratch operand']
  %s0 = inlined_call_operand.vmem [shape: f32[2,32], index: 0, kind: input, shape index: {}]
  %s1 = inlined_call_operand.vmem [shape: f32[32,32], index: 1, kind: input, shape index: {}]
  %s2 = inlined_call_operand.vmem [shape: f32[2,128,32], index: 2, kind: input, shape index: {}]
  %s3 = inlined_call_operand.hbm [shape: f32[2,128], index: 3, kind: output, shape index: {}]
  %s4 = sld [smem:[#allocation0]]
  $region30: #{tpu_custom_call.1} parent=0
    _
  %s6 = ssub.s32 1, %s4
  %s7 = scalar_select 0, %s6, %s4
  $region1: #{tpu_custom_call.1} parent=0
    #allocation3 [shape = 'u8[1024]{0}', space=vmem, size = 0x400, scoped, tag = 'output window, operand 0, single buffered']
    #allocation4 [shape = 's32[1]{0}', space=sflag, size = 0x4, scoped, tag = 'scoped memory for tpu_custom_call.1']
    %8 = vsyncpa [#allocation4], 0
    // Predicated region
    $region2: #{tpu_custom_call.1} parent=1 // pred_check
      _
    $region3: #{tpu_custom_call.1} parent=1 // pred_check_branch
      %10 = sbr.rel (0) target = $region5
    $region4: #{tpu_custom_call.1} parent=1 // pred_region
      _
    $region5: #{tpu_custom_call.1} parent=1 // pred_fallthru
      _
    // Predicated region
    $region6: #{tpu_custom_call.1} parent=1 // pred_check
      _
    $region7: #{tpu_custom_call.1} parent=1 // pred_check_branch
      %12 = sbr.rel (0) target = $region9
    $region8: #{tpu_custom_call.1} parent=1 // pred_region
      _
    $region9: #{tpu_custom_call.1} parent=1 // pred_fallthru
      _
    // Predicated region
    $region10: #{tpu_custom_call.1} parent=1 // pred_check
      _
    $region11: #{tpu_custom_call.1} parent=1 // pred_check_branch
      %14 = sbr.rel (0) target = $region13
    $region12: #{tpu_custom_call.1} parent=1 // pred_region
      _
    $region13: #{tpu_custom_call.1} parent=1 // pred_fallthru
      _
    %p15 = scmp.eq.s32.totalorder 0, 0
    // Predicated region
    $region14: #{tpu_custom_call.1} parent=1 // pred_check
      %p16 = pneg %p15
    $region15: #{tpu_custom_call.1} parent=1 // pred_check_branch
      %18 = sbr.rel (%p16) target = $region17
    $region16: #{tpu_custom_call.1} parent=1 // pred_region
      %v19 = vld [vmem:[%s0] sm:$0x3]
      %v20 = vld [vmem:[%s1] sm:$0xff]
      %v21 = vld [vmem:[%s1 + $0x8] sm:$0xff]
      %v22 = vld [vmem:[%s1 + $0x10] sm:$0xff]
      %v23 = vld [vmem:[%s1 + $0x18] sm:$0xff]
      %vm24 = vcmask 261120
      %v26 = vsel %vm24, %v19, 0
      %28 = vmatprep.subr.mxu0 0.0
      %29 = vmatpush1.msra.mxu0 %v20
      %30 = vmatprep.subr.mxu0 0.0
      %31 = vmatpush1.msra.mxu0 %v21
      %32 = vmatprep.subr.mxu0 0.0
      %33 = vmatpush1.msra.mxu0 %v22
      %34 = vmatprep.subr.mxu0 0.0
      %35 = vmatpush1.msra.mxu0 %v23
      %36 = vmatprep.subr.mxu0 0.0
      %37 = vmatpush1.msra.mxu0 0.0
      %38 = vmatprep.subr.mxu0 0.0
      %39 = vmatpush1.msra.mxu0 0.0
      %40 = vmatprep.subr.mxu0 0.0
      %41 = vmatpush1.msra.mxu0 0.0
      %42 = vmatprep.subr.mxu0 0.0
      %43 = vmatpush1.msra.mxu0 0.0
      %44 = vmatprep.subr.mxu0 0.0
      %45 = vmatpush1.msra.mxu0 0.0
      %46 = vmatprep.subr.mxu0 0.0
      %47 = vmatpush1.msra.mxu0 0.0
      %48 = vmatprep.subr.mxu0 0.0
      %49 = vmatpush1.msra.mxu0 0.0
      %50 = vmatprep.subr.mxu0 0.0
      %51 = vmatpush1.msra.mxu0 0.0
      %52 = vmatprep.subr.mxu0 0.0
      %53 = vmatpush1.msra.mxu0 0.0
      %54 = vmatprep.subr.mxu0 0.0
      %55 = vmatpush1.msra.mxu0 0.0
      %56 = vmatprep.subr.mxu0 0.0
      %57 = vmatpush1.msra.mxu0 0.0
      %58 = vmatprep.subr.mxu0 0.0
      %59 = vmatpush1.msra.mxu0 0.0
      %60 = vmatprep.subr.mxu0 0.0
      %61 = vmatpush1.msra.mxu0 0.0
      %62 = vmatprep.subr.mxu0 0.0
      %63 = vmatpush1.msra.mxu0 0.0
      %64 = vmatprep.subr.mxu0 0.0
      %65 = vmatpush1.msra.mxu0 0.0
      %66 = vmatprep.subr.mxu0 0.0
      %67 = vmatpush1.msra.mxu0 0.0
      %68 = vmatprep.subr.mxu0 0.0
      %69 = vmatpush1.msra.mxu0 0.0
      %70 = vmatprep.subr.mxu0 0.0
      %71 = vmatpush1.msra.mxu0 0.0
      %72 = vmatprep.subr.mxu0 0.0
      %73 = vmatpush1.msra.mxu0 0.0
      %74 = vmatprep.subr.mxu0 0.0
      %75 = vmatpush1.msra.mxu0 0.0
      %76 = vmatprep.subr.mxu0 0.0
      %77 = vmatpush1.msra.mxu0 0.0
      %78 = vmatprep.subr.mxu0 0.0
      %79 = vmatpush1.msra.mxu0 0.0
      %80 = vmatprep.subr.mxu0 0.0
      %81 = vmatpush1.msra.mxu0 0.0
      %82 = vmatprep.subr.mxu0 0.0
      %83 = vmatpush1.msra.mxu0 0.0
      %84 = vmatprep.subr.mxu0 0.0
      %85 = vmatpush1.msra.mxu0 0.0
      %86 = vmatprep.subr.mxu0 0.0
      %87 = vmatpush1.msra.mxu0 0.0
      %88 = vmatprep.subr.mxu0 0.0
      %89 = vmatpush1.msra.mxu0 0.0
      %90 = vmatprep.subr.mxu0 0.0
      %91 = vmatpush1.msra.mxu0 0.0
      %92 = vmatprep.mubr.f32.mxu0 0.0
      %93 = vmatmul.mubr.f32.gmra.mrb[0].mxu0 %v26
      %v94 = vpop.f32.mrb[0].mxu0
      %v95 = vadd.f32 0.0, %v94
      %v96 = vpop.f32.mrb[0].mxu0
      %97 = vdwg.mxu0
      %vm98 = vcmask 254976
      %99 = vst.msk [vmem:[#allocation2] sm:$0x3] %vm98, %v95
    $region17: #{tpu_custom_call.1} parent=1 // pred_fallthru
      _
    %v100 = vld [vmem:[%s2] sm:$0xff]
    %v101 = vld [vmem:[%s2 + $0x8] sm:$0xff]
    %v102 = vld [vmem:[%s2 + $0x10] sm:$0xff]
    %v103 = vld [vmem:[%s2 + $0x18] sm:$0xff]
    %v104 = vld [vmem:[%s2 + $0x20] sm:$0xff]
    %v105 = vld [vmem:[%s2 + $0x28] sm:$0xff]
    %v106 = vld [vmem:[%s2 + $0x30] sm:$0xff]
    %v107 = vld [vmem:[%s2 + $0x38] sm:$0xff]
    %v108 = vld [vmem:[%s2 + $0x40] sm:$0xff]
    %v109 = vld [vmem:[%s2 + $0x48] sm:$0xff]
    %v110 = vld [vmem:[%s2 + $0x50] sm:$0xff]
    %v111 = vld [vmem:[%s2 + $0x58] sm:$0xff]
    %v112 = vld [vmem:[%s2 + $0x60] sm:$0xff]
    %v113 = vld [vmem:[%s2 + $0x68] sm:$0xff]
    %v114 = vld [vmem:[%s2 + $0x70] sm:$0xff]
    %v115 = vld [vmem:[%s2 + $0x78] sm:$0xff]
    %v116 = vld [vmem:[%s2 + $0x80] sm:$0xff]
    %v117 = vld [vmem:[%s2 + $0x88] sm:$0xff]
    %v118 = vld [vmem:[%s2 + $0x90] sm:$0xff]
    %v119 = vld [vmem:[%s2 + $0x98] sm:$0xff]
    %v120 = vld [vmem:[%s2 + $0xa0] sm:$0xff]
    %v121 = vld [vmem:[%s2 + $0xa8] sm:$0xff]
    %v122 = vld [vmem:[%s2 + $0xb0] sm:$0xff]
    %v123 = vld [vmem:[%s2 + $0xb8] sm:$0xff]
    %v124 = vld [vmem:[%s2 + $0xc0] sm:$0xff]
    %v125 = vld [vmem:[%s2 + $0xc8] sm:$0xff]
    %v126 = vld [vmem:[%s2 + $0xd0] sm:$0xff]
    %v127 = vld [vmem:[%s2 + $0xd8] sm:$0xff]
    %v128 = vld [vmem:[%s2 + $0xe0] sm:$0xff]
    %v129 = vld [vmem:[%s2 + $0xe8] sm:$0xff]
    %v130 = vld [vmem:[%s2 + $0xf0] sm:$0xff]
    %v131 = vld [vmem:[%s2 + $0xf8] sm:$0xff]
    %v132 = vld [vmem:[#allocation2] sm:$0x3]
    %v135 = vunpack.c.l.s4 1966171168
    %v136 = vunpack.c.0.s8 %v135
    %v137 = vlaneseq
    %v138 = vshrl.u32 %v137, 7
    %v139 = vsub.s32 %v136, %v138
    %v140 = vrot.slane %v132, %v139
    %v141 = vcombine.high %v140, %v140
    %v143 = vunpack.c.l.s4 1966171168
    %v144 = vunpack.c.0.s8 %v143
    %v145 = vlaneseq
    %v146 = vshrl.u32 %v145, 7
    %v147 = vsub.s32 %v144, %v146
    %v148 = vrot.slane %v140, %v147
    %v150 = vunpack.c.l.s4 1966171168
    %v151 = vunpack.c.0.s8 %v150
    %v152 = vlaneseq
    %v153 = vshrl.u32 %v152, 7
    %v154 = vsub.s32 %v151, %v153
    %v155 = vrot.slane %v141, %v154
    %v156 = vlaneseq
    %v157 = vshrl.u32 %v156, 7
    %v158 = vsub.s32 0, %v157
    %v159 = vrot.slane %v148, %v158
    %v160 = vlaneseq
    %v161 = vshrl.u32 %v160, 7
    %v162 = vsub.s32 0, %v161
    %v163 = vrot.slane %v155, %v162
    %v166 = vmul.f32 %v100, %v159
    %v167 = vmul.f32 %v101, %v159
    %v168 = vmul.f32 %v102, %v159
    %v169 = vmul.f32 %v103, %v159
    %v170 = vmul.f32 %v104, %v159
    %v171 = vmul.f32 %v105, %v159
    %v172 = vmul.f32 %v106, %v159
    %v173 = vmul.f32 %v107, %v159
    %v174 = vmul.f32 %v108, %v159
    %v175 = vmul.f32 %v109, %v159
    %v176 = vmul.f32 %v110, %v159
    %v177 = vmul.f32 %v111, %v159
    %v178 = vmul.f32 %v112, %v159
    %v179 = vmul.f32 %v113, %v159
    %v180 = vmul.f32 %v114, %v159
    %v181 = vmul.f32 %v115, %v159
    %v182 = vmul.f32 %v116, %v163
    %v183 = vmul.f32 %v117, %v163
    %v184 = vmul.f32 %v118, %v163
    %v185 = vmul.f32 %v119, %v163
    %v186 = vmul.f32 %v120, %v163
    %v187 = vmul.f32 %v121, %v163
    %v188 = vmul.f32 %v122, %v163
    %v189 = vmul.f32 %v123, %v163
    %v190 = vmul.f32 %v124, %v163
    %v191 = vmul.f32 %v125, %v163
    %v192 = vmul.f32 %v126, %v163
    %v193 = vmul.f32 %v127, %v163
    %v194 = vmul.f32 %v128, %v163
    %v195 = vmul.f32 %v129, %v163
    %v196 = vmul.f32 %v130, %v163
    %v197 = vmul.f32 %v131, %v163
    %vm198 = vcmask 261120
    %v199 = vsel %vm198, %v166, 0.0
    %200 = vadd.xlane.f32.xlu0 %v199
    %v201 = vpop.xlane.xlu0 %200
    %v202 = vsel %vm198, %v167, 0.0
    %203 = vadd.xlane.f32.xlu0 %v202
    %v204 = vpop.xlane.xlu0 %203
    %v205 = vsel %vm198, %v168, 0.0
    %206 = vadd.xlane.f32.xlu0 %v205
    %v207 = vpop.xlane.xlu0 %206
    %v208 = vsel %vm198, %v169, 0.0
    %209 = vadd.xlane.f32.xlu0 %v208
    %v210 = vpop.xlane.xlu0 %209
    %v211 = vsel %vm198, %v170, 0.0
    %212 = vadd.xlane.f32.xlu0 %v211
    %v213 = vpop.xlane.xlu0 %212
    %v214 = vsel %vm198, %v171, 0.0
    %215 = vadd.xlane.f32.xlu0 %v214
    %v216 = vpop.xlane.xlu0 %215
    %v217 = vsel %vm198, %v172, 0.0
    %218 = vadd.xlane.f32.xlu0 %v217
    %v219 = vpop.xlane.xlu0 %218
    %v220 = vsel %vm198, %v173, 0.0
    %221 = vadd.xlane.f32.xlu0 %v220
    %v222 = vpop.xlane.xlu0 %221
    %v223 = vsel %vm198, %v174, 0.0
    %224 = vadd.xlane.f32.xlu0 %v223
    %v225 = vpop.xlane.xlu0 %224
    %v226 = vsel %vm198, %v175, 0.0
    %227 = vadd.xlane.f32.xlu0 %v226
    %v228 = vpop.xlane.xlu0 %227
    %v229 = vsel %vm198, %v176, 0.0
    %230 = vadd.xlane.f32.xlu0 %v229
    %v231 = vpop.xlane.xlu0 %230
    %v232 = vsel %vm198, %v177, 0.0
    %233 = vadd.xlane.f32.xlu0 %v232
    %v234 = vpop.xlane.xlu0 %233
    %v235 = vsel %vm198, %v178, 0.0
    %236 = vadd.xlane.f32.xlu0 %v235
    %v237 = vpop.xlane.xlu0 %236
    %v238 = vsel %vm198, %v179, 0.0
    %239 = vadd.xlane.f32.xlu0 %v238
    %v240 = vpop.xlane.xlu0 %239
    %v241 = vsel %vm198, %v180, 0.0
    %242 = vadd.xlane.f32.xlu0 %v241
    %v243 = vpop.xlane.xlu0 %242
    %v244 = vsel %vm198, %v181, 0.0
    %245 = vadd.xlane.f32.xlu0 %v244
    %v246 = vpop.xlane.xlu0 %245
    %v247 = vsel %vm198, %v182, 0.0
    %248 = vadd.xlane.f32.xlu0 %v247
    %v249 = vpop.xlane.xlu0 %248
    %v250 = vsel %vm198, %v183, 0.0
    %251 = vadd.xlane.f32.xlu0 %v250
    %v252 = vpop.xlane.xlu0 %251
    %v253 = vsel %vm198, %v184, 0.0
    %254 = vadd.xlane.f32.xlu0 %v253
    %v255 = vpop.xlane.xlu0 %254
    %v256 = vsel %vm198, %v185, 0.0
    %257 = vadd.xlane.f32.xlu0 %v256
    %v258 = vpop.xlane.xlu0 %257
    %v259 = vsel %vm198, %v186, 0.0
    %260 = vadd.xlane.f32.xlu0 %v259
    %v261 = vpop.xlane.xlu0 %260
    %v262 = vsel %vm198, %v187, 0.0
    %263 = vadd.xlane.f32.xlu0 %v262
    %v264 = vpop.xlane.xlu0 %263
    %v265 = vsel %vm198, %v188, 0.0
    %266 = vadd.xlane.f32.xlu0 %v265
    %v267 = vpop.xlane.xlu0 %266
    %v268 = vsel %vm198, %v189, 0.0
    %269 = vadd.xlane.f32.xlu0 %v268
    %v270 = vpop.xlane.xlu0 %269
    %v271 = vsel %vm198, %v190, 0.0
    %272 = vadd.xlane.f32.xlu0 %v271
    %v273 = vpop.xlane.xlu0 %272
    %v274 = vsel %vm198, %v191, 0.0
    %275 = vadd.xlane.f32.xlu0 %v274
    %v276 = vpop.xlane.xlu0 %275
    %v277 = vsel %vm198, %v192, 0.0
    %278 = vadd.xlane.f32.xlu0 %v277
    %v279 = vpop.xlane.xlu0 %278
    %v280 = vsel %vm198, %v193, 0.0
    %281 = vadd.xlane.f32.xlu0 %v280
    %v282 = vpop.xlane.xlu0 %281
    %v283 = vsel %vm198, %v194, 0.0
    %284 = vadd.xlane.f32.xlu0 %v283
    %v285 = vpop.xlane.xlu0 %284
    %v286 = vsel %vm198, %v195, 0.0
    %287 = vadd.xlane.f32.xlu0 %v286
    %v288 = vpop.xlane.xlu0 %287
    %v289 = vsel %vm198, %v196, 0.0
    %290 = vadd.xlane.f32.xlu0 %v289
    %v291 = vpop.xlane.xlu0 %290
    %v292 = vsel %vm198, %v197, 0.0
    %293 = vadd.xlane.f32.xlu0 %v292
    %v294 = vpop.xlane.xlu0 %293
    %s295 = smul.u32 0, 128
    %v328 = vlaneseq
    %v329 = vand.u32 %v328, 127
    %v330 = vlaneseq
    %v331 = vshrl.u32 %v330, 7
    %v332 = vsub.s32 %v329, %v331
    %v333 = vrot.slane %v201, %v332
    %v334 = vadd.s32 %v329, 4294967288
    %v335 = vlaneseq
    %v336 = vshrl.u32 %v335, 7
    %v337 = vsub.s32 %v334, %v336
    %v338 = vrot.slane %v204, %v337
    %vm339 = vcmask 130112
    %v340 = vsel %vm339, %v338, %v333
    %v341 = vadd.s32 %v329, 4294967280
    %v342 = vlaneseq
    %v343 = vshrl.u32 %v342, 7
    %v344 = vsub.s32 %v341, %v343
    %v345 = vrot.slane %v207, %v344
    %vm346 = vcmask 195712
    %v347 = vsel %vm346, %v345, %v340
    %v348 = vadd.s32 %v329, 4294967272
    %v349 = vlaneseq
    %v350 = vshrl.u32 %v349, 7
    %v351 = vsub.s32 %v348, %v350
    %v352 = vrot.slane %v210, %v351
    %vm353 = vcmask 261312
    %v354 = vsel %vm353, %v352, %v347
    %v355 = vadd.s32 %v329, 4294967264
    %v356 = vlaneseq
    %v357 = vshrl.u32 %v356, 7
    %v358 = vsub.s32 %v355, %v357
    %v359 = vrot.slane %v213, %v358
    %vm360 = vcmask 326912
    %v361 = vsel %vm360, %v359, %v354
    %v362 = vadd.s32 %v329, 4294967256
    %v363 = vlaneseq
    %v364 = vshrl.u32 %v363, 7
    %v365 = vsub.s32 %v362, %v364
    %v366 = vrot.slane %v216, %v365
    %vm367 = vcmask 392512
    %v368 = vsel %vm367, %v366, %v361
    %v369 = vadd.s32 %v329, 4294967248
    %v370 = vlaneseq
    %v371 = vshrl.u32 %v370, 7
    %v372 = vsub.s32 %v369, %v371
    %v373 = vrot.slane %v219, %v372
    %vm374 = vcmask 458112
    %v375 = vsel %vm374, %v373, %v368
    %v376 = vadd.s32 %v329, 4294967240
    %v377 = vlaneseq
    %v378 = vshrl.u32 %v377, 7
    %v379 = vsub.s32 %v376, %v378
    %v380 = vrot.slane %v222, %v379
    %vm381 = vcmask 523712
    %v382 = vsel %vm381, %v380, %v375
    %v383 = vadd.s32 %v329, 4294967232
    %v384 = vlaneseq
    %v385 = vshrl.u32 %v384, 7
    %v386 = vsub.s32 %v383, %v385
    %v387 = vrot.slane %v225, %v386
    %vm388 = vcmask 589312
    %v389 = vsel %vm388, %v387, %v382
    %v390 = vadd.s32 %v329, 4294967224
    %v391 = vlaneseq
    %v392 = vshrl.u32 %v391, 7
    %v393 = vsub.s32 %v390, %v392
    %v394 = vrot.slane %v228, %v393
    %vm395 = vcmask 654912
    %v396 = vsel %vm395, %v394, %v389
    %v397 = vadd.s32 %v329, 4294967216
    %v398 = vlaneseq
    %v399 = vshrl.u32 %v398, 7
    %v400 = vsub.s32 %v397, %v399
    %v401 = vrot.slane %v231, %v400
    %vm402 = vcmask 720512
    %v403 = vsel %vm402, %v401, %v396
    %v404 = vadd.s32 %v329, 4294967208
    %v405 = vlaneseq
    %v406 = vshrl.u32 %v405, 7
    %v407 = vsub.s32 %v404, %v406
    %v408 = vrot.slane %v234, %v407
    %vm409 = vcmask 786112
    %v410 = vsel %vm409, %v408, %v403
    %v411 = vadd.s32 %v329, 4294967200
    %v412 = vlaneseq
    %v413 = vshrl.u32 %v412, 7
    %v414 = vsub.s32 %v411, %v413
    %v415 = vrot.slane %v237, %v414
    %vm416 = vcmask 851712
    %v417 = vsel %vm416, %v415, %v410
    %v418 = vadd.s32 %v329, 4294967192
    %v419 = vlaneseq
    %v420 = vshrl.u32 %v419, 7
    %v421 = vsub.s32 %v418, %v420
    %v422 = vrot.slane %v240, %v421
    %vm423 = vcmask 917312
    %v424 = vsel %vm423, %v422, %v417
    %v425 = vadd.s32 %v329, 4294967184
    %v426 = vlaneseq
    %v427 = vshrl.u32 %v426, 7
    %v428 = vsub.s32 %v425, %v427
    %v429 = vrot.slane %v243, %v428
    %vm430 = vcmask 982912
    %v431 = vsel %vm430, %v429, %v424
    %v432 = vadd.s32 %v329, 4294967176
    %v433 = vlaneseq
    %v434 = vshrl.u32 %v433, 7
    %v435 = vsub.s32 %v432, %v434
    %v436 = vrot.slane %v246, %v435
    %vm437 = vcmask 1048512
    %v438 = vsel %vm437, %v436, %v431
    %v439 = vlaneseq
    %v440 = vshrl.u32 %v439, 7
    %v441 = vsub.s32 %v329, %v440
    %v442 = vrot.slane %v249, %v441
    %v443 = vlaneseq
    %v444 = vshrl.u32 %v443, 7
    %v445 = vsub.s32 %v334, %v444
    %v446 = vrot.slane %v252, %v445
    %v447 = vsel %vm339, %v446, %v442
    %v448 = vlaneseq
    %v449 = vshrl.u32 %v448, 7
    %v450 = vsub.s32 %v341, %v449
    %v451 = vrot.slane %v255, %v450
    %v452 = vsel %vm346, %v451, %v447
    %v453 = vlaneseq
    %v454 = vshrl.u32 %v453, 7
    %v455 = vsub.s32 %v348, %v454
    %v456 = vrot.slane %v258, %v455
    %v457 = vsel %vm353, %v456, %v452
    %v458 = vlaneseq
    %v459 = vshrl.u32 %v458, 7
    %v460 = vsub.s32 %v355, %v459
    %v461 = vrot.slane %v261, %v460
    %v462 = vsel %vm360, %v461, %v457
    %v463 = vlaneseq
    %v464 = vshrl.u32 %v463, 7
    %v465 = vsub.s32 %v362, %v464
    %v466 = vrot.slane %v264, %v465
    %v467 = vsel %vm367, %v466, %v462
    %v468 = vlaneseq
    %v469 = vshrl.u32 %v468, 7
    %v470 = vsub.s32 %v369, %v469
    %v471 = vrot.slane %v267, %v470
    %v472 = vsel %vm374, %v471, %v467
    %v473 = vlaneseq
    %v474 = vshrl.u32 %v473, 7
    %v475 = vsub.s32 %v376, %v474
    %v476 = vrot.slane %v270, %v475
    %v477 = vsel %vm381, %v476, %v472
    %v478 = vlaneseq
    %v479 = vshrl.u32 %v478, 7
    %v480 = vsub.s32 %v383, %v479
    %v481 = vrot.slane %v273, %v480
    %v482 = vsel %vm388, %v481, %v477
    %v483 = vlaneseq
    %v484 = vshrl.u32 %v483, 7
    %v485 = vsub.s32 %v390, %v484
    %v486 = vrot.slane %v276, %v485
    %v487 = vsel %vm395, %v486, %v482
    %v488 = vlaneseq
    %v489 = vshrl.u32 %v488, 7
    %v490 = vsub.s32 %v397, %v489
    %v491 = vrot.slane %v279, %v490
    %v492 = vsel %vm402, %v491, %v487
    %v493 = vlaneseq
    %v494 = vshrl.u32 %v493, 7
    %v495 = vsub.s32 %v404, %v494
    %v496 = vrot.slane %v282, %v495
    %v497 = vsel %vm409, %v496, %v492
    %v498 = vlaneseq
    %v499 = vshrl.u32 %v498, 7
    %v500 = vsub.s32 %v411, %v499
    %v501 = vrot.slane %v285, %v500
    %v502 = vsel %vm416, %v501, %v497
    %v503 = vlaneseq
    %v504 = vshrl.u32 %v503, 7
    %v505 = vsub.s32 %v418, %v504
    %v506 = vrot.slane %v288, %v505
    %v507 = vsel %vm423, %v506, %v502
    %v508 = vlaneseq
    %v509 = vshrl.u32 %v508, 7
    %v510 = vsub.s32 %v425, %v509
    %v511 = vrot.slane %v291, %v510
    %v512 = vsel %vm430, %v511, %v507
    %v513 = vlaneseq
    %v514 = vshrl.u32 %v513, 7
    %v515 = vsub.s32 %v432, %v514
    %v516 = vrot.slane %v294, %v515
    %v517 = vsel %vm437, %v516, %v512
    %vm518 = vcmask 1041409
    %v519 = vsel %vm518, %v517, %v438
    %s521 = sshra.s32 %s295, 7
    %s522 = sand.u32 %s295, 127
    %s523 = scalar_lea.vmem [#allocation3], %s521
    %524 = vst [vmem:[%s523] sm:$0x3] %v519
    // Predicated region
    $region18: #{tpu_custom_call.1} parent=1 // pred_check
      %p525 = pneg %p15
    $region19: #{tpu_custom_call.1} parent=1 // pred_check_branch
      %527 = sbr.rel (%p525) target = $region21
    $region20: #{tpu_custom_call.1} parent=1 // pred_region
      %v528 = vld [vmem:[#allocation3] sm:$0x3]
      %vm529 = vcmp.lt.s32.totalorder %v329, 8
      %v530 = vsel %vm529, %v528, -inf
      %vm531 = vcmask 1041408
      %v532 = vsel %vm531, %v530, -inf
      %533 = vmax.xlane.f32.xlu0 %v532
      %v534 = vpop.xlane.xlu0 %533
      %v535 = vsub.f32 %v530, %v534
      %v536 = vmul.f32 %v535, 1.442695
      %v537 = vpow.pop %v536
      %v538 = vsel %vm529, %v537, 0.0
      %v539 = vsel %vm531, %v538, 0.0
      %540 = vadd.xlane.f32.xlu0 %v539
      %v541 = vpop.xlane.xlu0 %540
      %v542 = vrcp.pop %v541
      %v543 = vmul.f32 %v538, %v542
      %544 = vst [vmem:[#allocation3] sm:$0x3] %v543
    $region21: #{tpu_custom_call.1} parent=1 // pred_fallthru
      _
    // Predicated region
    $region22: #{tpu_custom_call.1} parent=1 // pred_check
      _
    $region23: #{tpu_custom_call.1} parent=1 // pred_check_branch
      %546 = sbr.rel (0) target = $region25
    $region24: #{tpu_custom_call.1} parent=1 // pred_region
      %s548 = ssub.s32 32, 32
      %549 = vsyncadd [#allocation4], %s548
      %s551 = sshll.u32 [#allocation3], 4
      %s552 = int_to_ptr.vmem [resolvable:$true] %s551
      %554 = dma.vmem_to_hbm [thread:$0]  %s552, 32, %s3, [#allocation4]
    $region25: #{tpu_custom_call.1} parent=1 // pred_fallthru
      _
    // Predicated region
    $region26: #{tpu_custom_call.1} parent=1 // pred_check
      _
    $region27: #{tpu_custom_call.1} parent=1 // pred_check_branch
      %556 = sbr.rel (0) target = $region29
    $region28: #{tpu_custom_call.1} parent=1 // pred_region
      %557 = dma.done [#allocation4], 32
    $region29: #{tpu_custom_call.1} parent=1 // pred_fallthru
      _
    %558 = vsyncpa [#allocation4], 1

</llo_original>
